<compile_context>
chip_gen: v5e
topology: v5e:2x2
jax: 0.10.0
libtpu: 0.0.40
codegen_flags: <defaults>
</compile_context>

<pallas_src>
import functools

import jax
import jax.numpy as jnp
from jax.experimental import pallas as pl
from jax.experimental.pallas import tpu as pltpu

_LANE = 128


def _box_loss(pred_ref, target_ref, loss_type):
    """Per-box loss from (4, TM, 128) coordinate-plane refs -> (TM, 128) f32."""
    f32 = jnp.float32
    p_cx = pred_ref[0].astype(f32)
    p_cy = pred_ref[1].astype(f32)
    p_w = pred_ref[2].astype(f32)
    p_h = pred_ref[3].astype(f32)
    t_cx = target_ref[0].astype(f32)
    t_cy = target_ref[1].astype(f32)
    t_w = target_ref[2].astype(f32)
    t_h = target_ref[3].astype(f32)

    # Hoisted half-extents, shared by tl/br and the GIoU enclosing box.
    p_hw = p_w * 0.5
    p_hh = p_h * 0.5
    t_hw = t_w * 0.5
    t_hh = t_h * 0.5

    p_x1 = p_cx - p_hw
    p_x2 = p_cx + p_hw
    p_y1 = p_cy - p_hh
    p_y2 = p_cy + p_hh
    t_x1 = t_cx - t_hw
    t_x2 = t_cx + t_hw
    t_y1 = t_cy - t_hh
    t_y2 = t_cy + t_hh

    # Clamped intersection extents: identical to the (tl < br)-gated product in
    # the reference (both give exactly 0 when boxes don't overlap) but without
    # the compare / and / select full-tile temporaries.
    iw = jnp.maximum(jnp.minimum(p_x2, t_x2) - jnp.maximum(p_x1, t_x1), 0.0)
    ih = jnp.maximum(jnp.minimum(p_y2, t_y2) - jnp.maximum(p_y1, t_y1), 0.0)
    area_i = iw * ih

    area_p = p_w * p_h
    area_g = t_w * t_h
    # Exact divide keeps strict numerical parity with the PyTorch reference;
    # the kernel is HBM-bound, so the divide is not on the binding slot.
    iou = area_i / (area_p + area_g - area_i + 1e-16)

    if loss_type == 'iou':
        return 1.0 - iou * iou
    elif loss_type == 'giou':
        c_w = jnp.maximum(p_x2, t_x2) - jnp.minimum(p_x1, t_x1)
        c_h = jnp.maximum(p_y2, t_y2) - jnp.minimum(p_y1, t_y1)
        area_c = c_w * c_h
        giou = iou - (area_c - area_i) / jnp.maximum(area_c, 1e-16)
        return 1.0 - jnp.clip(giou, -1.0, 1.0)
    else:
        raise ValueError(f"unknown loss_type: {loss_type}")


def _iou_loss_map_kernel(pred_ref, target_ref, loss_ref, *, loss_type):
    # pred_ref/target_ref: (4, TM, 128); loss_ref: (TM, 128) lane-dense slab.
    loss_ref[...] = _box_loss(pred_ref, target_ref, loss_type).astype(loss_ref.dtype)


def _iou_loss_reduce_kernel(pred_ref, target_ref, out_ref, acc_ref, *,
                            loss_type, n, tm, steps):
    # Grid (ncs, steps): leading axis is "parallel" (one slice per TensorCore
    # on v7x), trailing axis is the sequential accumulation.
    c = pl.program_id(0)
    j = pl.program_id(1)

    @pl.when(j == 0)
    def _init():
        acc_ref[...] = jnp.zeros_like(acc_ref)

    loss = _box_loss(pred_ref, target_ref, loss_type)        # (tm, 128) f32

    blk = tm * _LANE
    block_start = (c * steps + j) * blk                      # first box index of block
    needs_mask = block_start + blk > n                       # block contains padding?

    @pl.when(needs_mask)
    def _masked_accumulate():
        row = jax.lax.broadcasted_iota(jnp.int32, loss.shape, 0)
        lane = jax.lax.broadcasted_iota(jnp.int32, loss.shape, 1)
        idx = block_start + row * _LANE + lane
        acc_ref[...] += jnp.where(idx < n, loss, 0.0)

    @pl.when(jnp.logical_not(needs_mask))
    def _accumulate():
        acc_ref[...] += loss

    @pl.when(j == steps - 1)
    def _finalize():
        # Single cross-lane/sublane reduce per core; broadcast into the (8,128)
        # output block (every element of block c holds core c's partial sum).
        out_ref[...] = jnp.zeros_like(out_ref) + jnp.sum(acc_ref[...])


def _bucket_rows(raw_rows, max_block_rows):
    """Round the 128-box row count up to a small bucket set (limits recompiles
    while keeping padded HBM traffic low)."""
    r = max(raw_rows, 16)
    if r >= max_block_rows:
        # Multiples of the tile size: exact grid, < one tile of padding.
        return max_block_rows * pl.cdiv(r, max_block_rows)
    p = pl.next_power_of_2(r)
    mid = (3 * p) // 4
    if r <= mid and mid % 16 == 0:
        return mid
    return p


def iou_loss(pred, target, *, reduction='none', loss_type='iou', max_block_rows=1024):
    """Pallas TPU equivalent of IOUloss.forward (output is float32)."""
    assert pred.shape[0] == target.shape[0]
    if reduction not in ('none', 'mean', 'sum'):
        raise ValueError(f"unknown reduction: {reduction}")
    if loss_type not in ('iou', 'giou'):
        raise ValueError(f"unknown loss_type: {loss_type}")

    pred = pred.reshape(-1, 4)
    target = target.reshape(-1, 4)
    n = pred.shape[0]

    if n == 0:  # empty box set: match torch semantics without launching a kernel
        if reduction == 'none':
            return jnp.zeros((0,), jnp.float32)
        if reduction == 'sum':
            return jnp.array(0.0, jnp.float32)
        return jnp.array(jnp.nan, jnp.float32)  # mean of an empty tensor

    rows = _bucket_rows(pl.cdiv(n, _LANE), max_block_rows)
    n_pad = rows * _LANE
    tm = min(rows, max_block_rows)
    grid_steps = rows // tm                     # exact by construction

    def to_planes(x):
        # (n, 4) -> (4, rows, 128) coordinate planes, in the input's native
        # dtype (the kernel upcasts to f32 on the VPU).  allow_input_fusion
        # lets XLA fuse this producer into the pallas_call operand read.
        xt = jnp.transpose(x)                            # (4, n)
        xt = jnp.pad(xt, ((0, 0), (0, n_pad - n)))       # (4, n_pad)
        return xt.reshape(4, rows, _LANE)

    pred_p = to_planes(pred)
    target_p = to_planes(target)

    flops_per_box = 40 if loss_type == 'giou' else 30
    in_bytes = 2 * 4 * int(pred_p.dtype.itemsize) * n_pad

    in_specs = [
        pl.BlockSpec((4, tm, _LANE), lambda i: (0, i, 0)),
        pl.BlockSpec((4, tm, _LANE), lambda i: (0, i, 0)),
    ]

    if reduction == 'none':
        kernel = functools.partial(_iou_loss_map_kernel, loss_type=loss_type)
        cost = pl.CostEstimate(flops=flops_per_box * n_pad, transcendentals=0,
                               bytes_accessed=in_bytes + 4 * n_pad)
        loss2d = pl.pallas_call(
            kernel,
            out_shape=jax.ShapeDtypeStruct((rows, _LANE), jnp.float32),
            grid_spec=pltpu.PrefetchScalarGridSpec(
                num_scalar_prefetch=0,
                grid=(grid_steps,),
                in_specs=in_specs,
                out_specs=pl.BlockSpec((tm, _LANE), lambda i: (i, 0)),
            ),
            compiler_params=pltpu.CompilerParams(
                dimension_semantics=("parallel",),
                allow_input_fusion=[True, True]),
            cost_estimate=cost,
        )(pred_p, target_p)
        # TODO(synk): fused consumers can take the padded (rows*128,) slab and
        # skip this trailing slice (an extra ~8*n_pad-byte XLA pass).
        return loss2d.reshape(-1)[:n]

    # 'mean' / 'sum': fused in-kernel reduction.
    ncs = 2 if (grid_steps >= 2 and grid_steps % 2 == 0) else 1
    steps = grid_steps // ncs
    kernel = functools.partial(_iou_loss_reduce_kernel, loss_type=loss_type,
                               n=n, tm=tm, steps=steps)
    cost = pl.CostEstimate(flops=flops_per_box * n_pad, transcendentals=0,
                           bytes_accessed=in_bytes + 4 * 8 * _LANE * ncs)
    partials = pl.pallas_call(
        kernel,
        out_shape=jax.ShapeDtypeStruct((8, ncs * _LANE), jnp.float32),
        grid_spec=pltpu.PrefetchScalarGridSpec(
            num_scalar_prefetch=0,
            grid=(ncs, steps),
            in_specs=[
                pl.BlockSpec((4, tm, _LANE), lambda c, j: (0, c * steps + j, 0)),
                pl.BlockSpec((4, tm, _LANE), lambda c, j: (0, c * steps + j, 0)),
            ],
            out_specs=pl.BlockSpec((8, _LANE), lambda c, j: (0, c)),
            scratch_shapes=[pltpu.VMEM((tm, _LANE), jnp.float32)],
        ),
        compiler_params=pltpu.CompilerParams(
            dimension_semantics=("parallel", "arbitrary"),
            allow_input_fusion=[True, True]),
        cost_estimate=cost,
    )(pred_p, target_p)

    # Every element of output column-block c equals core c's partial sum; pick
    # one representative per core and combine.
    total = jnp.sum(partials[0, ::_LANE])
    if reduction == 'mean':
        return total / n
    return total


def _iou_loss_ref(pred, target, *, reduction='none', loss_type='iou'):
    """Pure-JAX reference mirroring the PyTorch forward (for validation)."""
    pred = pred.reshape(-1, 4).astype(jnp.float32)
    target = target.reshape(-1, 4).astype(jnp.float32)
    tl = jnp.maximum(pred[:, :2] - pred[:, 2:] / 2, target[:, :2] - target[:, 2:] / 2)
    br = jnp.minimum(pred[:, :2] + pred[:, 2:] / 2, target[:, :2] + target[:, 2:] / 2)
    area_p = jnp.prod(pred[:, 2:], axis=1)
    area_g = jnp.prod(target[:, 2:], axis=1)
    en = jnp.prod((tl < br).astype(tl.dtype), axis=1)
    area_i = jnp.prod(br - tl, axis=1) * en
    iou = area_i / (area_p + area_g - area_i + 1e-16)
    if loss_type == 'iou':
        loss = 1 - iou ** 2
    else:
        c_tl = jnp.minimum(pred[:, :2] - pred[:, 2:] / 2, target[:, :2] - target[:, 2:] / 2)
        c_br = jnp.maximum(pred[:, :2] + pred[:, 2:] / 2, target[:, :2] + target[:, 2:] / 2)
        area_c = jnp.prod(c_br - c_tl, axis=1)
        giou = iou - (area_c - area_i) / jnp.maximum(area_c, 1e-16)
        loss = 1 - jnp.clip(giou, -1.0, 1.0)
    if reduction == 'mean':
        return loss.mean()
    elif reduction == 'sum':
        return loss.sum()
    return loss


if __name__ == "__main__":
    key = jax.random.PRNGKey(0)
    ok = True
    for n_boxes in (8, 300):   # small case + one that exercises padding/masking
        k1, k2, k3, k4 = jax.random.split(jax.random.fold_in(key, n_boxes), 4)
        pred_xy = jax.random.uniform(k1, (n_boxes, 2), jnp.float32, 0.0, 10.0)
        pred_wh = jax.random.uniform(k2, (n_boxes, 2), jnp.float32, 0.5, 4.0)
        tgt_xy = jax.random.uniform(k3, (n_boxes, 2), jnp.float32, 0.0, 10.0)
        tgt_wh = jax.random.uniform(k4, (n_boxes, 2), jnp.float32, 0.5, 4.0)
        pred = jnp.concatenate([pred_xy, pred_wh], axis=1)
        target = jnp.concatenate([tgt_xy, tgt_wh], axis=1)

        for loss_type in ('iou', 'giou'):
            for reduction in ('none', 'mean', 'sum'):
                out = iou_loss(pred, target, reduction=reduction, loss_type=loss_type)
                out = jax.block_until_ready(out)
                ref = _iou_loss_ref(pred, target, reduction=reduction, loss_type=loss_type)
                if not jnp.allclose(out, ref, atol=1e-4, rtol=1e-5):
                    ok = False

    if ok:
        print("KERNEL_OK")
</pallas_src>

<mosaic_0001>
module attributes {stable_mosaic.version = 11 : i64} {
  func.func @_iou_loss_map_kernel(%arg0: i32, %arg1: memref<4x16x128xf32, #tpu.memory_space<vmem>>, %arg2: memref<4x16x128xf32, #tpu.memory_space<vmem>>, %arg3: memref<16x128xf32, #tpu.memory_space<vmem>>) attributes {dimension_semantics = [#tpu.dimension_semantics<parallel>], iteration_bounds = array<i64: 1>, scalar_prefetch = 0 : i64, scratch_operands = 0 : i64, tpu.core_type = #tpu.core_type<tc>, window_params = [{transform_indices = @transform_0, window_bounds = array<i64: 4, 16, 128>}, {transform_indices = @transform_1, window_bounds = array<i64: 4, 16, 128>}, {transform_indices = @transform_2, window_bounds = array<i64: 16, 128>}]} {
    %c0 = arith.constant 0 : index
    %c0_0 = arith.constant 0 : index
    %c0_1 = arith.constant 0 : index
    %0 = vector.load %arg1[%c0, %c0_0, %c0_1] : memref<4x16x128xf32, #tpu.memory_space<vmem>>, vector<1x16x128xf32>
    %1 = vector.shape_cast %0 : vector<1x16x128xf32> to vector<16x128xf32>
    %c1 = arith.constant 1 : index
    %c0_2 = arith.constant 0 : index
    %c0_3 = arith.constant 0 : index
    %2 = vector.load %arg1[%c1, %c0_2, %c0_3] : memref<4x16x128xf32, #tpu.memory_space<vmem>>, vector<1x16x128xf32>
    %3 = vector.shape_cast %2 : vector<1x16x128xf32> to vector<16x128xf32>
    %c2 = arith.constant 2 : index
    %c0_4 = arith.constant 0 : index
    %c0_5 = arith.constant 0 : index
    %4 = vector.load %arg1[%c2, %c0_4, %c0_5] : memref<4x16x128xf32, #tpu.memory_space<vmem>>, vector<1x16x128xf32>
    %5 = vector.shape_cast %4 : vector<1x16x128xf32> to vector<16x128xf32>
    %c3 = arith.constant 3 : index
    %c0_6 = arith.constant 0 : index
    %c0_7 = arith.constant 0 : index
    %6 = vector.load %arg1[%c3, %c0_6, %c0_7] : memref<4x16x128xf32, #tpu.memory_space<vmem>>, vector<1x16x128xf32>
    %7 = vector.shape_cast %6 : vector<1x16x128xf32> to vector<16x128xf32>
    %c0_8 = arith.constant 0 : index
    %c0_9 = arith.constant 0 : index
    %c0_10 = arith.constant 0 : index
    %8 = vector.load %arg2[%c0_8, %c0_9, %c0_10] : memref<4x16x128xf32, #tpu.memory_space<vmem>>, vector<1x16x128xf32>
    %9 = vector.shape_cast %8 : vector<1x16x128xf32> to vector<16x128xf32>
    %c1_11 = arith.constant 1 : index
    %c0_12 = arith.constant 0 : index
    %c0_13 = arith.constant 0 : index
    %10 = vector.load %arg2[%c1_11, %c0_12, %c0_13] : memref<4x16x128xf32, #tpu.memory_space<vmem>>, vector<1x16x128xf32>
    %11 = vector.shape_cast %10 : vector<1x16x128xf32> to vector<16x128xf32>
    %c2_14 = arith.constant 2 : index
    %c0_15 = arith.constant 0 : index
    %c0_16 = arith.constant 0 : index
    %12 = vector.load %arg2[%c2_14, %c0_15, %c0_16] : memref<4x16x128xf32, #tpu.memory_space<vmem>>, vector<1x16x128xf32>
    %13 = vector.shape_cast %12 : vector<1x16x128xf32> to vector<16x128xf32>
    %c3_17 = arith.constant 3 : index
    %c0_18 = arith.constant 0 : index
    %c0_19 = arith.constant 0 : index
    %14 = vector.load %arg2[%c3_17, %c0_18, %c0_19] : memref<4x16x128xf32, #tpu.memory_space<vmem>>, vector<1x16x128xf32>
    %15 = vector.shape_cast %14 : vector<1x16x128xf32> to vector<16x128xf32>
    %cst = arith.constant 5.000000e-01 : f32
    %16 = vector.broadcast %cst : f32 to vector<16x128xf32>
    %17 = arith.mulf %5, %16 : vector<16x128xf32>
    %cst_20 = arith.constant 5.000000e-01 : f32
    %18 = vector.broadcast %cst_20 : f32 to vector<16x128xf32>
    %19 = arith.mulf %7, %18 : vector<16x128xf32>
    %cst_21 = arith.constant 5.000000e-01 : f32
    %20 = vector.broadcast %cst_21 : f32 to vector<16x128xf32>
    %21 = arith.mulf %13, %20 : vector<16x128xf32>
    %cst_22 = arith.constant 5.000000e-01 : f32
    %22 = vector.broadcast %cst_22 : f32 to vector<16x128xf32>
    %23 = arith.mulf %15, %22 : vector<16x128xf32>
    %24 = arith.subf %1, %17 : vector<16x128xf32>
    %25 = arith.addf %1, %17 : vector<16x128xf32>
    %26 = arith.subf %3, %19 : vector<16x128xf32>
    %27 = arith.addf %3, %19 : vector<16x128xf32>
    %28 = arith.subf %9, %21 : vector<16x128xf32>
    %29 = arith.addf %9, %21 : vector<16x128xf32>
    %30 = arith.subf %11, %23 : vector<16x128xf32>
    %31 = arith.addf %11, %23 : vector<16x128xf32>
    %32 = arith.minimumf %25, %29 : vector<16x128xf32>
    %33 = arith.maximumf %24, %28 : vector<16x128xf32>
    %34 = arith.subf %32, %33 : vector<16x128xf32>
    %cst_23 = arith.constant 0.000000e+00 : f32
    %35 = vector.broadcast %cst_23 : f32 to vector<16x128xf32>
    %36 = arith.maximumf %34, %35 : vector<16x128xf32>
    %37 = arith.minimumf %27, %31 : vector<16x128xf32>
    %38 = arith.maximumf %26, %30 : vector<16x128xf32>
    %39 = arith.subf %37, %38 : vector<16x128xf32>
    %cst_24 = arith.constant 0.000000e+00 : f32
    %40 = vector.broadcast %cst_24 : f32 to vector<16x128xf32>
    %41 = arith.maximumf %39, %40 : vector<16x128xf32>
    %42 = arith.mulf %36, %41 : vector<16x128xf32>
    %43 = arith.mulf %5, %7 : vector<16x128xf32>
    %44 = arith.mulf %13, %15 : vector<16x128xf32>
    %45 = arith.addf %43, %44 : vector<16x128xf32>
    %46 = arith.subf %45, %42 : vector<16x128xf32>
    %cst_25 = arith.constant 1.000000e-16 : f32
    %47 = vector.broadcast %cst_25 : f32 to vector<16x128xf32>
    %48 = arith.addf %46, %47 : vector<16x128xf32>
    %49 = arith.divf %42, %48 : vector<16x128xf32>
    %50 = arith.mulf %49, %49 : vector<16x128xf32>
    %cst_26 = arith.constant 1.000000e+00 : f32
    %51 = vector.broadcast %cst_26 : f32 to vector<16x128xf32>
    %52 = arith.subf %51, %50 : vector<16x128xf32>
    %c0_27 = arith.constant 0 : index
    %c0_28 = arith.constant 0 : index
    %53 = vector.load %arg3[%c0_27, %c0_28] : memref<16x128xf32, #tpu.memory_space<vmem>>, vector<16x128xf32>
    tpu.vector_store %arg3[%c0_27, %c0_28], %52 {strides = array<i32>} : memref<16x128xf32, #tpu.memory_space<vmem>>, vector<16x128xf32>,
    return
  }
  func.func @transform_0(%arg0: i32) -> (i32, i32, i32) {
    %c0_i32 = arith.constant 0 : i32
    %c0_i32_0 = arith.constant 0 : i32
    %c0_i32_1 = arith.constant 0 : i32
    return %c0_i32, %arg0, %c0_i32_0 : i32, i32, i32
  }
  func.func @transform_1(%arg0: i32) -> (i32, i32, i32) {
    %c0_i32 = arith.constant 0 : i32
    %c0_i32_0 = arith.constant 0 : i32
    %c0_i32_1 = arith.constant 0 : i32
    return %c0_i32, %arg0, %c0_i32_0 : i32, i32, i32
  }
  func.func @transform_2(%arg0: i32) -> (i32, i32) {
    %c0_i32 = arith.constant 0 : i32
    %c0_i32_0 = arith.constant 0 : i32
    return %arg0, %c0_i32 : i32, i32
  }
}

</mosaic_0001>

<llo_original>
// kernel: tpu_custom_call.1
$region0: #{tpu_custom_call.1}
  #allocation0 [shape = 'u32[]', space=smem, size = 0x4, offset = 0x4, fixed_abs, tag = 'smem constant byte address 0x4 - core index']
  #allocation1 [shape = 'u32[72,128]{1,0:T(1,128)}', space=vmem, size = 0x9000, scoped, tag = 'internal scratch']
  %s0 = inlined_call_operand.hbm [shape: f32[4,16,128], index: 0, kind: input, shape index: {}]
  %s1 = inlined_call_operand.hbm [shape: f32[4,16,128], index: 1, kind: input, shape index: {}]
  %s2 = inlined_call_operand.hbm [shape: f32[16,128], index: 2, kind: output, shape index: {}]
  %s3 = sld [smem:[#allocation0]]
  $region26: #{tpu_custom_call.1} parent=0
    _
  %s5 = ssub.s32 1, %s3
  %s6 = scalar_select 0, %s5, %s3
  $region1: #{tpu_custom_call.1} parent=0
    #allocation2 [shape = 'u8[32768]{0}', space=vmem, size = 0x8000, scoped, tag = 'input window, operand 0, single buffered']
    #allocation3 [shape = 's32[1]{0}', space=sflag, size = 0x4, scoped, tag = 'scoped memory for tpu_custom_call.1']
    #allocation4 [shape = 's32[1]{0}', space=sflag, size = 0x4, scoped, tag = 'scoped memory for tpu_custom_call.1']
    #allocation5 [shape = 'u8[32768]{0}', space=vmem, size = 0x8000, scoped, tag = 'input window, operand 1, single buffered']
    #allocation6 [shape = 's32[1]{0}', space=sflag, size = 0x4, scoped, tag = 'scoped memory for tpu_custom_call.1']
    #allocation7 [shape = 'u8[8192]{0}', space=vmem, size = 0x2000, scoped, tag = 'output window, operand 0, single buffered']
    %7 = vsyncpa [#allocation3], 0
    %8 = vsyncpa [#allocation6], 0
    %9 = vsyncpa [#allocation4], 0
    // Predicated region
    $region2: #{tpu_custom_call.1} parent=1 // pred_check
      _
    $region3: #{tpu_custom_call.1} parent=1 // pred_check_branch
      %11 = sbr.rel (0) target = $region5
    $region4: #{tpu_custom_call.1} parent=1 // pred_region
      %13 = vsyncadd [#allocation3], 0
      %s14 = sshll.u32 %s0, 4
      %s15 = int_to_ptr.hbm [resolvable:$true] %s14
      %s16 = sshll.u32 [#allocation2], 4
      %s17 = int_to_ptr.vmem [resolvable:$true] %s16
      %22 = dma.hbm_to_vmem [thread:$0]  %s15, 1024, %s17, [#allocation3], 128, 128, 8
    $region5: #{tpu_custom_call.1} parent=1 // pred_fallthru
      _
    // Predicated region
    $region6: #{tpu_custom_call.1} parent=1 // pred_check
      _
    $region7: #{tpu_custom_call.1} parent=1 // pred_check_branch
      %24 = sbr.rel (0) target = $region9
    $region8: #{tpu_custom_call.1} parent=1 // pred_region
      %26 = vsyncadd [#allocation6], 0
      %s27 = sshll.u32 %s1, 4
      %s28 = int_to_ptr.hbm [resolvable:$true] %s27
      %s29 = sshll.u32 [#allocation5], 4
      %s30 = int_to_ptr.vmem [resolvable:$true] %s29
      %35 = dma.hbm_to_vmem [thread:$0]  %s28, 1024, %s30, [#allocation6], 128, 128, 8
    $region9: #{tpu_custom_call.1} parent=1 // pred_fallthru
      _
    // Predicated region
    $region10: #{tpu_custom_call.1} parent=1 // pred_check
      _
    $region11: #{tpu_custom_call.1} parent=1 // pred_check_branch
      %37 = sbr.rel (0) target = $region13
    $region12: #{tpu_custom_call.1} parent=1 // pred_region
      %39 = dma.done [#allocation3], 1024
    $region13: #{tpu_custom_call.1} parent=1 // pred_fallthru
      _
    // Predicated region
    $region14: #{tpu_custom_call.1} parent=1 // pred_check
      _
    $region15: #{tpu_custom_call.1} parent=1 // pred_check_branch
      %41 = sbr.rel (0) target = $region17
    $region16: #{tpu_custom_call.1} parent=1 // pred_region
      %43 = dma.done [#allocation6], 1024
    $region17: #{tpu_custom_call.1} parent=1 // pred_fallthru
      _
    %v44 = vld [vmem:[#allocation2] sm:$0xff]
    %v45 = vld [vmem:[#allocation2 + $0x8] sm:$0xff]
    %s46 = scalar_lea.vmem [#allocation2], 16
    %v47 = vld [vmem:[%s46] sm:$0xff]
    %v48 = vld [vmem:[%s46 + $0x8] sm:$0xff]
    %s49 = scalar_lea.vmem [#allocation2], 32
    %v50 = vld [vmem:[%s49] sm:$0xff]
    %v51 = vld [vmem:[%s49 + $0x8] sm:$0xff]
    %s52 = scalar_lea.vmem [#allocation2], 48
    %v53 = vld [vmem:[%s52] sm:$0xff]
    %v54 = vld [vmem:[%s52 + $0x8] sm:$0xff]
    %v55 = vld [vmem:[#allocation5] sm:$0xff]
    %v56 = vld [vmem:[#allocation5 + $0x8] sm:$0xff]
    %s57 = scalar_lea.vmem [#allocation5], 16
    %v58 = vld [vmem:[%s57] sm:$0xff]
    %v59 = vld [vmem:[%s57 + $0x8] sm:$0xff]
    %s60 = scalar_lea.vmem [#allocation5], 32
    %v61 = vld [vmem:[%s60] sm:$0xff]
    %v62 = vld [vmem:[%s60 + $0x8] sm:$0xff]
    %s63 = scalar_lea.vmem [#allocation5], 48
    %v64 = vld [vmem:[%s63] sm:$0xff]
    %v65 = vld [vmem:[%s63 + $0x8] sm:$0xff]
    %v66 = vmul.f32 %v50, 0.5
    %v67 = vmul.f32 %v51, 0.5
    %v68 = vmul.f32 %v53, 0.5
    %v69 = vmul.f32 %v54, 0.5
    %v70 = vmul.f32 %v61, 0.5
    %v71 = vmul.f32 %v62, 0.5
    %v72 = vmul.f32 %v64, 0.5
    %v73 = vmul.f32 %v65, 0.5
    %v74 = vsub.f32 %v44, %v66
    %v75 = vsub.f32 %v45, %v67
    %v76 = vadd.f32 %v44, %v66
    %v77 = vadd.f32 %v45, %v67
    %v78 = vsub.f32 %v47, %v68
    %v79 = vsub.f32 %v48, %v69
    %v80 = vadd.f32 %v47, %v68
    %v81 = vadd.f32 %v48, %v69
    %v82 = vsub.f32 %v55, %v70
    %v83 = vsub.f32 %v56, %v71
    %v84 = vadd.f32 %v55, %v70
    %v85 = vadd.f32 %v56, %v71
    %v86 = vsub.f32 %v58, %v72
    %v87 = vsub.f32 %v59, %v73
    %v88 = vadd.f32 %v58, %v72
    %v89 = vadd.f32 %v59, %v73
    %v90 = vmin.f32 %v76, %v84
    %v91 = vmin.f32 %v77, %v85
    %v92 = vmax.f32 %v74, %v82
    %v93 = vmax.f32 %v75, %v83
    %v94 = vsub.f32 %v90, %v92
    %v95 = vsub.f32 %v91, %v93
    %v96 = vmax.f32 %v94, 0.0
    %v97 = vmax.f32 %v95, 0.0
    %v98 = vmin.f32 %v80, %v88
    %v99 = vmin.f32 %v81, %v89
    %v100 = vmax.f32 %v78, %v86
    %v101 = vmax.f32 %v79, %v87
    %v102 = vsub.f32 %v98, %v100
    %v103 = vsub.f32 %v99, %v101
    %v104 = vmax.f32 %v102, 0.0
    %v105 = vmax.f32 %v103, 0.0
    %v106 = vmul.f32 %v96, %v104
    %v107 = vmul.f32 %v97, %v105
    %v108 = vmul.f32 %v50, %v53
    %v109 = vmul.f32 %v51, %v54
    %v110 = vmul.f32 %v61, %v64
    %v111 = vmul.f32 %v62, %v65
    %v112 = vadd.f32 %v108, %v110
    %v113 = vadd.f32 %v109, %v111
    %v114 = vsub.f32 %v112, %v106
    %v115 = vsub.f32 %v113, %v107
    %v116 = vadd.f32 %v114, 1e-16
    %v117 = vadd.f32 %v115, 1e-16
    %v118 = vrcp.pop %v116
    %v119 = vmul.f32 %v116, %v118
    %v120 = vsub.f32 1.0, %v119
    %v121 = vmul.f32 %v118, %v120
    %v122 = vadd.f32 %v118, %v121
    %vm123 = vweird.f32 %v116
    %vm124 = vweird.f32 %v118
    %vm125 = vmor %vm123, %vm124
    %v126 = vsel %vm125, %v118, %v122
    %v127 = vand.u32 2147483647, %v116
    %vm128 = vcmp.eq.f32.partialorder %v127, 8.507059e+37
    %v129 = vand.u32 %v116, 2147483648
    %v130 = vor.u32 1.1754944e-38, %v129
    %v131 = vsel %vm128, %v130, %v126
    %v132 = vmul.f32 %v106, %v131
    %v133 = vrcp.pop %v117
    %v134 = vmul.f32 %v117, %v133
    %v135 = vsub.f32 1.0, %v134
    %v136 = vmul.f32 %v133, %v135
    %v137 = vadd.f32 %v133, %v136
    %vm138 = vweird.f32 %v117
    %vm139 = vweird.f32 %v133
    %vm140 = vmor %vm138, %vm139
    %v141 = vsel %vm140, %v133, %v137
    %v142 = vand.u32 2147483647, %v117
    %vm143 = vcmp.eq.f32.partialorder %v142, 8.507059e+37
    %v144 = vand.u32 %v117, 2147483648
    %v145 = vor.u32 1.1754944e-38, %v144
    %v146 = vsel %vm143, %v145, %v141
    %v147 = vmul.f32 %v107, %v146
    %v148 = vmul.f32 %v132, %v132
    %v149 = vmul.f32 %v147, %v147
    %v150 = vsub.f32 1.0, %v148
    %v151 = vsub.f32 1.0, %v149
    %152 = vst [vmem:[#allocation7] sm:$0xff] %v150
    %153 = vst [vmem:[#allocation7 + $0x8] sm:$0xff] %v151
    // Predicated region
    $region18: #{tpu_custom_call.1} parent=1 // pred_check
      _
    $region19: #{tpu_custom_call.1} parent=1 // pred_check_branch
      %155 = sbr.rel (0) target = $region21
    $region20: #{tpu_custom_call.1} parent=1 // pred_region
      %157 = vsyncadd [#allocation4], 0
      %s158 = sshll.u32 [#allocation7], 4
      %s159 = int_to_ptr.vmem [resolvable:$true] %s158
      %s160 = sshll.u32 %s2, 4
      %s161 = int_to_ptr.hbm [resolvable:$true] %s160
      %166 = dma.vmem_to_hbm [thread:$0]  %s159, 256, %s161, [#allocation4], 128, 128, 8
    $region21: #{tpu_custom_call.1} parent=1 // pred_fallthru
      _
    // Predicated region
    $region22: #{tpu_custom_call.1} parent=1 // pred_check
      _
    $region23: #{tpu_custom_call.1} parent=1 // pred_check_branch
      %168 = sbr.rel (0) target = $region25
    $region24: #{tpu_custom_call.1} parent=1 // pred_region
      %170 = dma.done [#allocation4], 256
    $region25: #{tpu_custom_call.1} parent=1 // pred_fallthru
      _
    %171 = vsyncpa [#allocation3], 1
    %172 = vsyncpa [#allocation6], 1
    %173 = vsyncpa [#allocation4], 1

</llo_original>
